<compile_context>
chip_gen: v7x
topology: tpu7x:2x2x1
jax: 0.10.0
libtpu: 0.0.40
codegen_flags: <defaults>
</compile_context>

<pallas_src>
import jax
import jax.numpy as jnp
from jax.experimental import pallas as pl
from jax.experimental.pallas import tpu as pltpu


def discriminator_kernel(x_ref, w1_ref, b1_ref, w2_ref, b2_ref, w3_ref, b3_ref, o_ref):
    x = x_ref[...]                                                      # (TB, D) bf16

    # Layer 1: (TB, D) @ (D, H) on the MXU, f32 accumulate.
    h1 = jnp.dot(x, w1_ref[...], preferred_element_type=jnp.float32)   # (TB, H) f32
    h1 = h1 + b1_ref[...]
    h1 = jnp.maximum(h1, 0.2 * h1)                                      # LeakyReLU(0.2)

    # Layer 2: (TB, H) @ (H, H).
    h2 = jnp.dot(h1.astype(jnp.bfloat16), w2_ref[...],
                 preferred_element_type=jnp.float32)                    # (TB, H) f32
    h2 = h2 + b2_ref[...]
    h2 = jnp.maximum(h2, 0.2 * h2)

    # Layer 3 (H -> 1): contract over H with the batch landing on the lane axis,
    # producing a lane-dense (1, TB) row instead of a masked (TB, 1) column.
    h3 = jax.lax.dot_general(
        w3_ref[...], h2.astype(jnp.bfloat16),
        dimension_numbers=(((1,), (1,)), ((), ())),
        preferred_element_type=jnp.float32)                             # (1, TB) f32
    logits = h3 + b3_ref[0, 0]                                          # scalar bias (SMEM)

    o_ref[...] = jax.nn.sigmoid(logits).reshape(o_ref.shape).astype(o_ref.dtype)


def discriminator_forward(x, params, *, block_batch=256):
    """x: [B, image_size] float32. params: dict of [fan_in, fan_out] weights / (1, fan_out) biases."""
    B, D = x.shape
    H = params["w1"].shape[1]
    mm_dtype = jnp.bfloat16

    # Batch tile: multiple of 8 sublanes; >=128 keeps the output store fully lane-dense.
    if B <= block_batch:
        TB = max(8, -(-B // 8) * 8)          # single grid step, rounded up to 8
    else:
        TB = block_batch
    G = pl.cdiv(B, TB)
    B_pad = G * TB

    x_bf = x.astype(mm_dtype)
    if B_pad != B:
        x_bf = jnp.pad(x_bf, ((0, B_pad - B), (0, 0)))

    # Matmul operands in bf16; biases stay f32.
    w1 = params["w1"].astype(mm_dtype)                   # (D, H)
    w2 = params["w2"].astype(mm_dtype)                   # (H, H)
    w3 = params["w3"].reshape(1, H).astype(mm_dtype)     # (1, H) row
    b1 = params["b1"].astype(jnp.float32)                # (1, H)
    b2 = params["b2"].astype(jnp.float32)                # (1, H)
    b3 = params["b3"].reshape(1, 1).astype(jnp.float32)  # (1, 1) scalar

    def resident(shape):
        # Constant block index across the grid -> DMA'd once, stays VMEM-resident.
        return pl.BlockSpec(shape, lambda i: (0,) * len(shape))

    flops = 2 * B_pad * (D * H + H * H + H)
    bytes_accessed = (x_bf.size * 2 + (w1.size + w2.size + w3.size) * 2
                      + (b1.size + b2.size + b3.size) * 4 + B_pad * 4)

    out = pl.pallas_call(
        discriminator_kernel,
        out_shape=jax.ShapeDtypeStruct((G, 1, TB), jnp.float32),
        grid=(G,),
        in_specs=[
            pl.BlockSpec((TB, D), lambda i: (i, 0)),              # x: streamed batch tiles
            resident((D, H)), resident((1, H)),                   # w1, b1
            resident((H, H)), resident((1, H)),                   # w2, b2
            resident((1, H)),                                     # w3 (row)
            pl.BlockSpec(memory_space=pltpu.MemorySpace.SMEM),    # b3 scalar
        ],
        out_specs=pl.BlockSpec((1, 1, TB), lambda i: (i, 0, 0)),  # lane-dense logits
        compiler_params=pltpu.CompilerParams(
            dimension_semantics=("parallel",),
            vmem_limit_bytes=32 * 1024 * 1024,
        ),
        cost_estimate=pl.CostEstimate(flops=flops, transcendentals=B_pad,
                                      bytes_accessed=bytes_accessed),
    )(x_bf, w1, b1, w2, b2, w3, b3)

    # Grid step i, lane j  <->  batch row i*TB + j, so a row-major reshape restores order.
    return out.reshape(B_pad, 1)[:B]


def init_params(key, image_size, hidden_size):
    """Mimics PyTorch nn.Linear default init; weights stored pre-transposed [in, out]."""
    ks = jax.random.split(key, 6)

    def linear(kw, kb, fan_in, fan_out):
        bound = 1.0 / jnp.sqrt(fan_in)
        w = jax.random.uniform(kw, (fan_in, fan_out), jnp.float32, -bound, bound)
        b = jax.random.uniform(kb, (1, fan_out), jnp.float32, -bound, bound)
        return w, b

    w1, b1 = linear(ks[0], ks[1], image_size, hidden_size)
    w2, b2 = linear(ks[2], ks[3], hidden_size, hidden_size)
    w3, b3 = linear(ks[4], ks[5], hidden_size, 1)
    return dict(w1=w1, b1=b1, w2=w2, b2=b2, w3=w3, b3=b3)


def reference_forward_f32(x, p):
    z1 = x @ p["w1"] + p["b1"]
    h1 = jnp.where(z1 > 0, z1, 0.2 * z1)
    z2 = h1 @ p["w2"] + p["b2"]
    h2 = jnp.where(z2 > 0, z2, 0.2 * z2)
    return jax.nn.sigmoid(h2 @ p["w3"] + p["b3"])


def reference_forward_bf16(x, p):
    bf, f32 = jnp.bfloat16, jnp.float32
    z1 = jnp.dot(x.astype(bf), p["w1"].astype(bf), preferred_element_type=f32) + p["b1"]
    h1 = jnp.maximum(z1, 0.2 * z1)
    z2 = jnp.dot(h1.astype(bf), p["w2"].astype(bf), preferred_element_type=f32) + p["b2"]
    h2 = jnp.maximum(z2, 0.2 * z2)
    z3 = jnp.dot(h2.astype(bf), p["w3"].astype(bf), preferred_element_type=f32) + p["b3"]
    return jax.nn.sigmoid(z3)


if __name__ == "__main__":
    key = jax.random.PRNGKey(0)
    batch = 32             # small demo batch (single grid step, rounded to 8 sublanes)
    image_size = 128       # small flattened-image size, lane-aligned
    hidden_size = 256      # PyTorch module default

    k_x, k_p = jax.random.split(key)
    x = jax.random.normal(k_x, (batch, image_size), dtype=jnp.float32)
    params = init_params(k_p, image_size, hidden_size)

    out = discriminator_forward(x, params, block_batch=256)
    out = jax.block_until_ready(out)
    assert out.shape == (batch, 1)

    ref_bf16 = reference_forward_bf16(x, params)   # matches kernel numerics (bf16 matmuls)
    ref_f32 = reference_forward_f32(x, params)     # pure f32 reference
    assert jnp.allclose(out, ref_bf16, atol=2e-3, rtol=2e-3), "mismatch vs bf16-matched reference"
    assert jnp.allclose(out, ref_f32, atol=5e-2, rtol=0.0), "mismatch vs f32 reference"

    print("KERNEL_OK")
</pallas_src>

<mosaic_0001>
module attributes {stable_mosaic.version = 11 : i64} {
  func.func @discriminator_kernel(%arg0: i32, %arg1: memref<32x128xbf16, #tpu.memory_space<vmem>>, %arg2: memref<128x256xbf16, #tpu.memory_space<vmem>>, %arg3: memref<1x256xf32, #tpu.memory_space<vmem>>, %arg4: memref<256x256xbf16, #tpu.memory_space<vmem>>, %arg5: memref<1x256xf32, #tpu.memory_space<vmem>>, %arg6: memref<1x256xbf16, #tpu.memory_space<vmem>>, %arg7: memref<1x1xf32, #tpu.memory_space<smem>>, %arg8: memref<1x1x32xf32, #tpu.memory_space<vmem>>) attributes {dimension_semantics = [#tpu.dimension_semantics<parallel>], iteration_bounds = array<i64: 1>, scalar_prefetch = 0 : i64, scratch_operands = 0 : i64, tpu.core_type = #tpu.core_type<tc>, window_params = [{transform_indices = @transform_0, window_bounds = array<i64: 32, 128>}, {pipeline_mode = #tpu.pipeline_mode<synchronous>, transform_indices = @transform_1, window_bounds = array<i64: 128, 256>}, {pipeline_mode = #tpu.pipeline_mode<synchronous>, transform_indices = @transform_2, window_bounds = array<i64: 1, 256>}, {pipeline_mode = #tpu.pipeline_mode<synchronous>, transform_indices = @transform_3, window_bounds = array<i64: 256, 256>}, {pipeline_mode = #tpu.pipeline_mode<synchronous>, transform_indices = @transform_4, window_bounds = array<i64: 1, 256>}, {pipeline_mode = #tpu.pipeline_mode<synchronous>, transform_indices = @transform_5, window_bounds = array<i64: 1, 256>}, {transform_indices = @transform_6, window_bounds = array<i64: 1, 1>}, {transform_indices = @transform_7, window_bounds = array<i64: 1, 1, 32>}]} {
    %c0 = arith.constant 0 : index
    %c0_0 = arith.constant 0 : index
    %0 = vector.load %arg1[%c0, %c0_0] : memref<32x128xbf16, #tpu.memory_space<vmem>>, vector<32x128xbf16>
    %c0_1 = arith.constant 0 : index
    %c0_2 = arith.constant 0 : index
    %1 = vector.load %arg2[%c0_1, %c0_2] : memref<128x256xbf16, #tpu.memory_space<vmem>>, vector<128x256xbf16>
    %cst = arith.constant dense<0.000000e+00> : vector<32x256xf32>
    %2 = tpu.matmul %0, %1, %cst {dimension_numbers = #tpu.dot_dimension_numbers<[1], [0], [0], [1], [0, 0, 1, 1], [], []>} : vector<32x128xbf16>, vector<128x256xbf16>, vector<32x256xf32> -> vector<32x256xf32>
    %c0_3 = arith.constant 0 : index
    %c0_4 = arith.constant 0 : index
    %3 = vector.load %arg3[%c0_3, %c0_4] : memref<1x256xf32, #tpu.memory_space<vmem>>, vector<1x256xf32>
    %4 = vector.broadcast %3 : vector<1x256xf32> to vector<32x256xf32>
    %5 = arith.addf %2, %4 : vector<32x256xf32>
    %cst_5 = arith.constant 2.000000e-01 : f32
    %6 = vector.broadcast %cst_5 : f32 to vector<32x256xf32>
    %7 = arith.mulf %6, %5 : vector<32x256xf32>
    %8 = arith.maximumf %5, %7 : vector<32x256xf32>
    %9 = arith.truncf %8 : vector<32x256xf32> to vector<32x256xbf16>
    %c0_6 = arith.constant 0 : index
    %c0_7 = arith.constant 0 : index
    %10 = vector.load %arg4[%c0_6, %c0_7] : memref<256x256xbf16, #tpu.memory_space<vmem>>, vector<256x256xbf16>
    %cst_8 = arith.constant dense<0.000000e+00> : vector<32x256xf32>
    %11 = tpu.matmul %9, %10, %cst_8 {dimension_numbers = #tpu.dot_dimension_numbers<[1], [0], [0], [1], [0, 0, 1, 1], [], []>} : vector<32x256xbf16>, vector<256x256xbf16>, vector<32x256xf32> -> vector<32x256xf32>
    %c0_9 = arith.constant 0 : index
    %c0_10 = arith.constant 0 : index
    %12 = vector.load %arg5[%c0_9, %c0_10] : memref<1x256xf32, #tpu.memory_space<vmem>>, vector<1x256xf32>
    %13 = vector.broadcast %12 : vector<1x256xf32> to vector<32x256xf32>
    %14 = arith.addf %11, %13 : vector<32x256xf32>
    %cst_11 = arith.constant 2.000000e-01 : f32
    %15 = vector.broadcast %cst_11 : f32 to vector<32x256xf32>
    %16 = arith.mulf %15, %14 : vector<32x256xf32>
    %17 = arith.maximumf %14, %16 : vector<32x256xf32>
    %c0_12 = arith.constant 0 : index
    %c0_13 = arith.constant 0 : index
    %18 = vector.load %arg6[%c0_12, %c0_13] : memref<1x256xbf16, #tpu.memory_space<vmem>>, vector<1x256xbf16>
    %19 = arith.truncf %17 : vector<32x256xf32> to vector<32x256xbf16>
    %cst_14 = arith.constant dense<0.000000e+00> : vector<1x32xf32>
    %20 = tpu.matmul %18, %19, %cst_14 {dimension_numbers = #tpu.dot_dimension_numbers<[1], [1], [0], [0], [0, 0, 1, 0], [], []>} : vector<1x256xbf16>, vector<32x256xbf16>, vector<1x32xf32> -> vector<1x32xf32>
    %c0_15 = arith.constant 0 : index
    %c0_16 = arith.constant 0 : index
    %21 = memref.load %arg7[%c0_15, %c0_16] : memref<1x1xf32, #tpu.memory_space<smem>>
    %22 = vector.broadcast %21 : f32 to vector<1x32xf32>
    %23 = arith.addf %20, %22 : vector<1x32xf32>
    %24 = arith.negf %23 : vector<1x32xf32>
    %25 = math.exp %24 : vector<1x32xf32>
    %cst_17 = arith.constant 1.000000e+00 : f32
    %26 = vector.broadcast %cst_17 : f32 to vector<1x32xf32>
    %27 = arith.addf %26, %25 : vector<1x32xf32>
    %28 = arith.divf %26, %27 : vector<1x32xf32>
    %29 = vector.shape_cast %28 : vector<1x32xf32> to vector<1x1x32xf32>
    %c0_18 = arith.constant 0 : index
    %c0_19 = arith.constant 0 : index
    %c0_20 = arith.constant 0 : index
    %30 = vector.load %arg8[%c0_18, %c0_19, %c0_20] : memref<1x1x32xf32, #tpu.memory_space<vmem>>, vector<1x1x32xf32>
    tpu.vector_store %arg8[%c0_18, %c0_19, %c0_20], %29 {strides = array<i32>} : memref<1x1x32xf32, #tpu.memory_space<vmem>>, vector<1x1x32xf32>,
    return
  }
  func.func @transform_0(%arg0: i32) -> (i32, i32) {
    %c0_i32 = arith.constant 0 : i32
    %c0_i32_0 = arith.constant 0 : i32
    return %arg0, %c0_i32 : i32, i32
  }
  func.func @transform_1(%arg0: i32) -> (i32, i32) {
    %c0_i32 = arith.constant 0 : i32
    %c0_i32_0 = arith.constant 0 : i32
    %c0_i32_1 = arith.constant 0 : i32
    return %c0_i32, %c0_i32_0 : i32, i32
  }
  func.func @transform_2(%arg0: i32) -> (i32, i32) {
    %c0_i32 = arith.constant 0 : i32
    %c0_i32_0 = arith.constant 0 : i32
    %c0_i32_1 = arith.constant 0 : i32
    return %c0_i32, %c0_i32_0 : i32, i32
  }
  func.func @transform_3(%arg0: i32) -> (i32, i32) {
    %c0_i32 = arith.constant 0 : i32
    %c0_i32_0 = arith.constant 0 : i32
    %c0_i32_1 = arith.constant 0 : i32
    return %c0_i32, %c0_i32_0 : i32, i32
  }
  func.func @transform_4(%arg0: i32) -> (i32, i32) {
    %c0_i32 = arith.constant 0 : i32
    %c0_i32_0 = arith.constant 0 : i32
    %c0_i32_1 = arith.constant 0 : i32
    return %c0_i32, %c0_i32_0 : i32, i32
  }
  func.func @transform_5(%arg0: i32) -> (i32, i32) {
    %c0_i32 = arith.constant 0 : i32
    %c0_i32_0 = arith.constant 0 : i32
    %c0_i32_1 = arith.constant 0 : i32
    return %c0_i32, %c0_i32_0 : i32, i32
  }
  func.func @transform_6(%arg0: i32) -> (i32, i32) {
    %c0_i32 = arith.constant 0 : i32
    %c0_i32_0 = arith.constant 0 : i32
    %c0_i32_1 = arith.constant 0 : i32
    return %c0_i32, %c0_i32_0 : i32, i32
  }
  func.func @transform_7(%arg0: i32) -> (i32, i32, i32) {
    %c0_i32 = arith.constant 0 : i32
    %c0_i32_0 = arith.constant 0 : i32
    %c0_i32_1 = arith.constant 0 : i32
    return %arg0, %c0_i32, %c0_i32_0 : i32, i32, i32
  }
}

</mosaic_0001>

<llo_original>
// kernel: tpu_custom_call.1
$region0: #{tpu_custom_call.1}
  #allocation0 [shape = 'u32[]', space=smem, size = 0x4, offset = 0x4, fixed_abs, tag = 'smem constant byte address 0x4 - core index']
  #allocation1 [shape = 'u32[144,128]{1,0:T(1,128)}', space=vmem, size = 0x12000, scoped, tag = 'internal scratch']
  #allocation2 [shape = 'f32[1,1]{1,0:T(1,128)S(6)}', space=smem, size = 0x200, scoped, tag = 'scoped memory for tpu_custom_call.1']
  %s0 = inlined_call_operand.hbm [shape: bf16[32,128], index: 0, kind: input, shape index: {}]
  %s1 = inlined_call_operand.hbm [shape: bf16[128,256], index: 1, kind: input, shape index: {}]
  %s2 = inlined_call_operand.vmem [shape: f32[1,256], index: 2, kind: input, shape index: {}]
  %s3 = inlined_call_operand.hbm [shape: bf16[256,256], index: 3, kind: input, shape index: {}]
  %s4 = inlined_call_operand.vmem [shape: f32[1,256], index: 4, kind: input, shape index: {}]
  %s5 = inlined_call_operand.vmem [shape: bf16[1,256], index: 5, kind: input, shape index: {}]
  %s6 = inlined_call_operand.<no memory space> [shape: f32[1,1], index: 6, kind: input, shape index: {}]
  %s7 = inlined_call_operand.hbm [shape: f32[1,1,32], index: 7, kind: output, shape index: {}]
  %s8 = sld [smem:[#allocation0]]
  $region50: #{tpu_custom_call.1} parent=0
    _
  %s10 = ssub.s32 1, %s8
  %s11 = scalar_select 0, %s10, %s8
  %12 = sst [smem:[#allocation2]] %s6
  $region1: #{tpu_custom_call.1} parent=0
    #allocation3 [shape = 'u8[8192]{0}', space=vmem, size = 0x2000, scoped, tag = 'input window, operand 0, single buffered']
    #allocation4 [shape = 's32[1]{0}', space=sflag, size = 0x4, scoped, tag = 'scoped memory for tpu_custom_call.1']
    #allocation5 [shape = 's32[1]{0}', space=sflag, size = 0x4, scoped, tag = 'scoped memory for tpu_custom_call.1']
    #allocation6 [shape = 'u8[65536]{0}', space=vmem, size = 0x10000, scoped, tag = 'input window, operand 1, single buffered']
    #allocation7 [shape = 's32[1]{0}', space=sflag, size = 0x4, scoped, tag = 'scoped memory for tpu_custom_call.1']
    #allocation8 [shape = 'u8[131072]{0}', space=vmem, size = 0x20000, scoped, tag = 'input window, operand 3, single buffered']
    #allocation9 [shape = 'u8[512]{0}', space=vmem, size = 0x400, scoped, tag = 'output window, operand 0, single buffered']
    %13 = vsyncpa [#allocation4], 0
    %14 = vsyncpa [#allocation7], 0
    %15 = vsyncpa [#allocation5], 0
    // Predicated region
    $region2: #{tpu_custom_call.1} parent=1 // pred_check
      _
    $region3: #{tpu_custom_call.1} parent=1 // pred_check_branch
      %17 = sbr.rel (0) target = $region5
    $region4: #{tpu_custom_call.1} parent=1 // pred_region
      %s19 = ssub.s32 256, 256
      %20 = vsyncadd [#allocation4], %s19
      %s21 = sshll.u32 [#allocation3], 4
      %s22 = int_to_ptr.vmem [resolvable:$true] %s21
      %27 = dma.hbm_to_vmem [thread:$0]  %s0, 256, %s22, [#allocation4], 64, 64, 4
    $region5: #{tpu_custom_call.1} parent=1 // pred_fallthru
      _
    // Predicated region
    $region6: #{tpu_custom_call.1} parent=1 // pred_check
      _
    $region7: #{tpu_custom_call.1} parent=1 // pred_check_branch
      %29 = sbr.rel (0) target = $region9
    $region8: #{tpu_custom_call.1} parent=1 // pred_region
      %s31 = ssub.s32 2048, 2048
      %32 = vsyncadd [#allocation7], %s31
      %s33 = sshll.u32 [#allocation6], 4
      %s34 = int_to_ptr.vmem [resolvable:$true] %s33
      %39 = dma.hbm_to_vmem [thread:$0]  %s1, 2048, %s34, [#allocation7], 128, 128, 8
    $region9: #{tpu_custom_call.1} parent=1 // pred_fallthru
      _
    // Predicated region
    $region10: #{tpu_custom_call.1} parent=1 // pred_check
      _
    $region11: #{tpu_custom_call.1} parent=1 // pred_check_branch
      %41 = sbr.rel (0) target = $region13
    $region12: #{tpu_custom_call.1} parent=1 // pred_region
      _
    $region13: #{tpu_custom_call.1} parent=1 // pred_fallthru
      _
    // Predicated region
    $region14: #{tpu_custom_call.1} parent=1 // pred_check
      _
    $region15: #{tpu_custom_call.1} parent=1 // pred_check_branch
      %43 = sbr.rel (0) target = $region17
    $region16: #{tpu_custom_call.1} parent=1 // pred_region
      %s45 = ssub.s32 4096, 4096
      %46 = vsyncadd [#allocation7], %s45
      %s47 = sshll.u32 [#allocation8], 4
      %s48 = int_to_ptr.vmem [resolvable:$true] %s47
      %53 = dma.hbm_to_vmem [thread:$0]  %s3, 4096, %s48, [#allocation7], 128, 128, 8
    $region17: #{tpu_custom_call.1} parent=1 // pred_fallthru
      _
    // Predicated region
    $region18: #{tpu_custom_call.1} parent=1 // pred_check
      _
    $region19: #{tpu_custom_call.1} parent=1 // pred_check_branch
      %55 = sbr.rel (0) target = $region21
    $region20: #{tpu_custom_call.1} parent=1 // pred_region
      _
    $region21: #{tpu_custom_call.1} parent=1 // pred_fallthru
      _
    // Predicated region
    $region22: #{tpu_custom_call.1} parent=1 // pred_check
      _
    $region23: #{tpu_custom_call.1} parent=1 // pred_check_branch
      %57 = sbr.rel (0) target = $region25
    $region24: #{tpu_custom_call.1} parent=1 // pred_region
      _
    $region25: #{tpu_custom_call.1} parent=1 // pred_fallthru
      _
    // Predicated region
    $region26: #{tpu_custom_call.1} parent=1 // pred_check
      _
    $region27: #{tpu_custom_call.1} parent=1 // pred_check_branch
      %59 = sbr.rel (0) target = $region29
    $region28: #{tpu_custom_call.1} parent=1 // pred_region
      _
    $region29: #{tpu_custom_call.1} parent=1 // pred_fallthru
      _
    // Predicated region
    $region30: #{tpu_custom_call.1} parent=1 // pred_check
      _
    $region31: #{tpu_custom_call.1} parent=1 // pred_check_branch
      %61 = sbr.rel (0) target = $region33
    $region32: #{tpu_custom_call.1} parent=1 // pred_region
      %62 = dma.done [#allocation4], 256
    $region33: #{tpu_custom_call.1} parent=1 // pred_fallthru
      _
    // Predicated region
    $region34: #{tpu_custom_call.1} parent=1 // pred_check
      _
    $region35: #{tpu_custom_call.1} parent=1 // pred_check_branch
      %64 = sbr.rel (0) target = $region37
    $region36: #{tpu_custom_call.1} parent=1 // pred_region
      %65 = dma.done [#allocation7], 2048
    $region37: #{tpu_custom_call.1} parent=1 // pred_fallthru
      _
    // Predicated region
    $region38: #{tpu_custom_call.1} parent=1 // pred_check
      _
    $region39: #{tpu_custom_call.1} parent=1 // pred_check_branch
      %67 = sbr.rel (0) target = $region41
    $region40: #{tpu_custom_call.1} parent=1 // pred_region
      %68 = dma.done [#allocation7], 4096
    $region41: #{tpu_custom_call.1} parent=1 // pred_fallthru
      _
    %v70 = vld [vmem:[#allocation3] sm:$0xf]
    %v71 = vld [vmem:[#allocation3 + $0x4] sm:$0xf]
    %v72 = vld [vmem:[#allocation3 + $0x8] sm:$0xf]
    %v73 = vld [vmem:[#allocation3 + $0xc] sm:$0xf]
    %v74 = vld [vmem:[#allocation6] sm:$0xff]
    %v75 = vld [vmem:[#allocation6 + $0x8] sm:$0xff]
    %v76 = vld [vmem:[#allocation6 + $0x10] sm:$0xff]
    %v77 = vld [vmem:[#allocation6 + $0x18] sm:$0xff]
    %v78 = vld [vmem:[#allocation6 + $0x20] sm:$0xff]
    %v79 = vld [vmem:[#allocation6 + $0x28] sm:$0xff]
    %v80 = vld [vmem:[#allocation6 + $0x30] sm:$0xff]
    %v81 = vld [vmem:[#allocation6 + $0x38] sm:$0xff]
    %v82 = vld [vmem:[#allocation6 + $0x40] sm:$0xff]
    %v83 = vld [vmem:[#allocation6 + $0x48] sm:$0xff]
    %v84 = vld [vmem:[#allocation6 + $0x50] sm:$0xff]
    %v85 = vld [vmem:[#allocation6 + $0x58] sm:$0xff]
    %v86 = vld [vmem:[#allocation6 + $0x60] sm:$0xff]
    %v87 = vld [vmem:[#allocation6 + $0x68] sm:$0xff]
    %v88 = vld [vmem:[#allocation6 + $0x70] sm:$0xff]
    %v89 = vld [vmem:[#allocation6 + $0x78] sm:$0xff]
    %v90 = vld [vmem:[%s2] sm:$0x3]
    %v92 = vlaneseq
    %v93 = vshrl.u32 %v92, 7
    %v94 = vsub.s32 0, %v93
    %v95 = vrot.slane %v90, %v94
    %v96 = vlaneseq
    %v97 = vshrl.u32 %v96, 7
    %v98 = vsub.s32 1, %v97
    %v99 = vrot.slane %v90, %v98
    %v106 = vunpack.c.l.b16 %v70
    %v107 = vunpack.c.l.b16 %v71
    %v108 = vunpack.c.l.b16 %v72
    %v109 = vunpack.c.l.b16 %v73
    %v110 = vpack.c.b16 %v107, %v106
    %v111 = vpack.c.b16 %v109, %v108
    %v130 = vunpack.c.l.b16 %v74
    %v131 = vunpack.c.h.b16 %v74
    %v132 = vunpack.c.l.b16 %v75
    %v133 = vunpack.c.h.b16 %v75
    %v134 = vunpack.c.l.b16 %v76
    %v135 = vunpack.c.h.b16 %v76
    %v136 = vunpack.c.l.b16 %v77
    %v137 = vunpack.c.h.b16 %v77
    %v138 = vunpack.c.l.b16 %v78
    %v139 = vunpack.c.h.b16 %v78
    %v140 = vunpack.c.l.b16 %v79
    %v141 = vunpack.c.h.b16 %v79
    %v142 = vunpack.c.l.b16 %v80
    %v143 = vunpack.c.h.b16 %v80
    %v144 = vunpack.c.l.b16 %v81
    %v145 = vunpack.c.h.b16 %v81
    %v146 = vunpack.c.l.b16 %v82
    %v147 = vunpack.c.h.b16 %v82
    %v148 = vunpack.c.l.b16 %v83
    %v149 = vunpack.c.h.b16 %v83
    %v150 = vunpack.c.l.b16 %v84
    %v151 = vunpack.c.h.b16 %v84
    %v152 = vunpack.c.l.b16 %v85
    %v153 = vunpack.c.h.b16 %v85
    %v154 = vunpack.c.l.b16 %v86
    %v155 = vunpack.c.h.b16 %v86
    %v156 = vunpack.c.l.b16 %v87
    %v157 = vunpack.c.h.b16 %v87
    %v158 = vunpack.c.l.b16 %v88
    %v159 = vunpack.c.h.b16 %v88
    %v160 = vunpack.c.l.b16 %v89
    %v161 = vunpack.c.h.b16 %v89
    %v162 = vpack.c.b16 %v132, %v130
    %v163 = vpack.c.b16 %v133, %v131
    %v164 = vpack.c.b16 %v136, %v134
    %v165 = vpack.c.b16 %v137, %v135
    %v166 = vpack.c.b16 %v140, %v138
    %v167 = vpack.c.b16 %v141, %v139
    %v168 = vpack.c.b16 %v144, %v142
    %v169 = vpack.c.b16 %v145, %v143
    %v170 = vpack.c.b16 %v148, %v146
    %v171 = vpack.c.b16 %v149, %v147
    %v172 = vpack.c.b16 %v152, %v150
    %v173 = vpack.c.b16 %v153, %v151
    %v174 = vpack.c.b16 %v156, %v154
    %v175 = vpack.c.b16 %v157, %v155
    %v176 = vpack.c.b16 %v160, %v158
    %v177 = vpack.c.b16 %v161, %v159
    %194 = vmatprep.subr.bf16.mxu0 %v163
    %195 = vmatpush1.bf16.msra.mxu0 %v162
    %196 = vmatprep.subr.bf16.mxu0 %v165
    %197 = vmatpush1.bf16.msra.mxu0 %v164
    %198 = vmatprep.subr.bf16.mxu0 %v167
    %199 = vmatpush1.bf16.msra.mxu0 %v166
    %200 = vmatprep.subr.bf16.mxu0 %v169
    %201 = vmatpush1.bf16.msra.mxu0 %v168
    %202 = vmatprep.subr.bf16.mxu0 %v171
    %203 = vmatpush1.bf16.msra.mxu0 %v170
    %204 = vmatprep.subr.bf16.mxu0 %v173
    %205 = vmatpush1.bf16.msra.mxu0 %v172
    %206 = vmatprep.subr.bf16.mxu0 %v175
    %207 = vmatpush1.bf16.msra.mxu0 %v174
    %208 = vmatprep.subr.bf16.mxu0 %v177
    %209 = vmatpush1.bf16.msra.mxu0 %v176
    %210 = vmatprep.subr.bf16.mxu0 0
    %211 = vmatpush1.bf16.msra.mxu0 0
    %212 = vmatprep.subr.bf16.mxu0 0
    %213 = vmatpush1.bf16.msra.mxu0 0
    %214 = vmatprep.subr.bf16.mxu0 0
    %215 = vmatpush1.bf16.msra.mxu0 0
    %216 = vmatprep.subr.bf16.mxu0 0
    %217 = vmatpush1.bf16.msra.mxu0 0
    %218 = vmatprep.subr.bf16.mxu0 0
    %219 = vmatpush1.bf16.msra.mxu0 0
    %220 = vmatprep.subr.bf16.mxu0 0
    %221 = vmatpush1.bf16.msra.mxu0 0
    %222 = vmatprep.subr.bf16.mxu0 0
    %223 = vmatpush1.bf16.msra.mxu0 0
    %224 = vmatprep.subr.bf16.mxu0 0
    %225 = vmatpush1.bf16.msra.mxu0 0
    %226 = vmatprep.mubr.bf16.mxu0 0
    %227 = vmatmul.mubr.bf16.gmra.mrb[0].mxu0 %v110
    %v228 = vpop.f32.mrb[0].mxu0
    %v229 = vadd.f32 %v95, %v228
    %v230 = vpop.f32.mrb[0].mxu0
    %v231 = vadd.f32 %v99, %v230
    %v232 = vpop.f32.mrb[0].mxu0
    %v233 = vadd.f32 %v95, %v232
    %v234 = vpop.f32.mrb[0].mxu0
    %v235 = vadd.f32 %v99, %v234
    %236 = vmatprep.mubr.bf16.mxu0 0
    %237 = vmatmul.mubr.bf16.gmra.mrb[0].mxu0 %v111
    %v238 = vpop.f32.mrb[0].mxu0
    %v239 = vadd.f32 %v95, %v238
    %v240 = vpop.f32.mrb[0].mxu0
    %v241 = vadd.f32 %v99, %v240
    %v242 = vpop.f32.mrb[0].mxu0
    %v243 = vadd.f32 %v95, %v242
    %v244 = vpop.f32.mrb[0].mxu0
    %v245 = vadd.f32 %v99, %v244
    %246 = vdwg.mxu0
    %v247 = vmul.f32 %v229, 0.2
    %v248 = vmul.f32 %v231, 0.2
    %v249 = vmul.f32 %v233, 0.2
    %v250 = vmul.f32 %v235, 0.2
    %v251 = vmul.f32 %v239, 0.2
    %v252 = vmul.f32 %v241, 0.2
    %v253 = vmul.f32 %v243, 0.2
    %v254 = vmul.f32 %v245, 0.2
    %v255 = vmax.f32 %v229, %v247
    %v256 = vmax.f32 %v231, %v248
    %v257 = vmax.f32 %v233, %v249
    %v258 = vmax.f32 %v235, %v250
    %v259 = vmax.f32 %v239, %v251
    %v260 = vmax.f32 %v241, %v252
    %v261 = vmax.f32 %v243, %v253
    %v262 = vmax.f32 %v245, %v254
    %v263 = vpack.c.bf16 %v257, %v255
    %v264 = vpack.c.bf16 %v258, %v256
    %v265 = vpack.c.bf16 %v261, %v259
    %v266 = vpack.c.bf16 %v262, %v260
    %v267 = vld [vmem:[#allocation8] sm:$0xff]
    %v268 = vld [vmem:[#allocation8 + $0x8] sm:$0xff]
    %v269 = vld [vmem:[#allocation8 + $0x10] sm:$0xff]
    %v270 = vld [vmem:[#allocation8 + $0x18] sm:$0xff]
    %v271 = vld [vmem:[#allocation8 + $0x20] sm:$0xff]
    %v272 = vld [vmem:[#allocation8 + $0x28] sm:$0xff]
    %v273 = vld [vmem:[#allocation8 + $0x30] sm:$0xff]
    %v274 = vld [vmem:[#allocation8 + $0x38] sm:$0xff]
    %v275 = vld [vmem:[#allocation8 + $0x40] sm:$0xff]
    %v276 = vld [vmem:[#allocation8 + $0x48] sm:$0xff]
    %v277 = vld [vmem:[#allocation8 + $0x50] sm:$0xff]
    %v278 = vld [vmem:[#allocation8 + $0x58] sm:$0xff]
    %v279 = vld [vmem:[#allocation8 + $0x60] sm:$0xff]
    %v280 = vld [vmem:[#allocation8 + $0x68] sm:$0xff]
    %v281 = vld [vmem:[#allocation8 + $0x70] sm:$0xff]
    %v282 = vld [vmem:[#allocation8 + $0x78] sm:$0xff]
    %v283 = vld [vmem:[#allocation8 + $0x80] sm:$0xff]
    %v284 = vld [vmem:[#allocation8 + $0x88] sm:$0xff]
    %v285 = vld [vmem:[#allocation8 + $0x90] sm:$0xff]
    %v286 = vld [vmem:[#allocation8 + $0x98] sm:$0xff]
    %v287 = vld [vmem:[#allocation8 + $0xa0] sm:$0xff]
    %v288 = vld [vmem:[#allocation8 + $0xa8] sm:$0xff]
    %v289 = vld [vmem:[#allocation8 + $0xb0] sm:$0xff]
    %v290 = vld [vmem:[#allocation8 + $0xb8] sm:$0xff]
    %v291 = vld [vmem:[#allocation8 + $0xc0] sm:$0xff]
    %v292 = vld [vmem:[#allocation8 + $0xc8] sm:$0xff]
    %v293 = vld [vmem:[#allocation8 + $0xd0] sm:$0xff]
    %v294 = vld [vmem:[#allocation8 + $0xd8] sm:$0xff]
    %v295 = vld [vmem:[#allocation8 + $0xe0] sm:$0xff]
    %v296 = vld [vmem:[#allocation8 + $0xe8] sm:$0xff]
    %v297 = vld [vmem:[#allocation8 + $0xf0] sm:$0xff]
    %v298 = vld [vmem:[#allocation8 + $0xf8] sm:$0xff]
    %v299 = vld [vmem:[%s4] sm:$0x3]
    %v301 = vlaneseq
    %v302 = vshrl.u32 %v301, 7
    %v303 = vsub.s32 0, %v302
    %v304 = vrot.slane %v299, %v303
    %v305 = vlaneseq
    %v306 = vshrl.u32 %v305, 7
    %v307 = vsub.s32 1, %v306
    %v308 = vrot.slane %v299, %v307
    %v343 = vunpack.c.l.b16 %v267
    %v344 = vunpack.c.h.b16 %v267
    %v345 = vunpack.c.l.b16 %v268
    %v346 = vunpack.c.h.b16 %v268
    %v347 = vunpack.c.l.b16 %v269
    %v348 = vunpack.c.h.b16 %v269
    %v349 = vunpack.c.l.b16 %v270
    %v350 = vunpack.c.h.b16 %v270
    %v351 = vunpack.c.l.b16 %v271
    %v352 = vunpack.c.h.b16 %v271
    %v353 = vunpack.c.l.b16 %v272
    %v354 = vunpack.c.h.b16 %v272
    %v355 = vunpack.c.l.b16 %v273
    %v356 = vunpack.c.h.b16 %v273
    %v357 = vunpack.c.l.b16 %v274
    %v358 = vunpack.c.h.b16 %v274
    %v359 = vunpack.c.l.b16 %v275
    %v360 = vunpack.c.h.b16 %v275
    %v361 = vunpack.c.l.b16 %v276
    %v362 = vunpack.c.h.b16 %v276
    %v363 = vunpack.c.l.b16 %v277
    %v364 = vunpack.c.h.b16 %v277
    %v365 = vunpack.c.l.b16 %v278
    %v366 = vunpack.c.h.b16 %v278
    %v367 = vunpack.c.l.b16 %v279
    %v368 = vunpack.c.h.b16 %v279
    %v369 = vunpack.c.l.b16 %v280
    %v370 = vunpack.c.h.b16 %v280
    %v371 = vunpack.c.l.b16 %v281
    %v372 = vunpack.c.h.b16 %v281
    %v373 = vunpack.c.l.b16 %v282
    %v374 = vunpack.c.h.b16 %v282
    %v375 = vunpack.c.l.b16 %v283
    %v376 = vunpack.c.h.b16 %v283
    %v377 = vunpack.c.l.b16 %v284
    %v378 = vunpack.c.h.b16 %v284
    %v379 = vunpack.c.l.b16 %v285
    %v380 = vunpack.c.h.b16 %v285
    %v381 = vunpack.c.l.b16 %v286
    %v382 = vunpack.c.h.b16 %v286
    %v383 = vunpack.c.l.b16 %v287
    %v384 = vunpack.c.h.b16 %v287
    %v385 = vunpack.c.l.b16 %v288
    %v386 = vunpack.c.h.b16 %v288
    %v387 = vunpack.c.l.b16 %v289
    %v388 = vunpack.c.h.b16 %v289
    %v389 = vunpack.c.l.b16 %v290
    %v390 = vunpack.c.h.b16 %v290
    %v391 = vunpack.c.l.b16 %v291
    %v392 = vunpack.c.h.b16 %v291
    %v393 = vunpack.c.l.b16 %v292
    %v394 = vunpack.c.h.b16 %v292
    %v395 = vunpack.c.l.b16 %v293
    %v396 = vunpack.c.h.b16 %v293
    %v397 = vunpack.c.l.b16 %v294
    %v398 = vunpack.c.h.b16 %v294
    %v399 = vunpack.c.l.b16 %v295
    %v400 = vunpack.c.h.b16 %v295
    %v401 = vunpack.c.l.b16 %v296
    %v402 = vunpack.c.h.b16 %v296
    %v403 = vunpack.c.l.b16 %v297
    %v404 = vunpack.c.h.b16 %v297
    %v405 = vunpack.c.l.b16 %v298
    %v406 = vunpack.c.h.b16 %v298
    %v407 = vpack.c.b16 %v345, %v343
    %v408 = vpack.c.b16 %v346, %v344
    %v409 = vpack.c.b16 %v349, %v347
    %v410 = vpack.c.b16 %v350, %v348
    %v411 = vpack.c.b16 %v353, %v351
    %v412 = vpack.c.b16 %v354, %v352
    %v413 = vpack.c.b16 %v357, %v355
    %v414 = vpack.c.b16 %v358, %v356
    %v415 = vpack.c.b16 %v361, %v359
    %v416 = vpack.c.b16 %v362, %v360
    %v417 = vpack.c.b16 %v365, %v363
    %v418 = vpack.c.b16 %v366, %v364
    %v419 = vpack.c.b16 %v369, %v367
    %v420 = vpack.c.b16 %v370, %v368
    %v421 = vpack.c.b16 %v373, %v371
    %v422 = vpack.c.b16 %v374, %v372
    %v423 = vpack.c.b16 %v377, %v375
    %v424 = vpack.c.b16 %v378, %v376
    %v425 = vpack.c.b16 %v381, %v379
    %v426 = vpack.c.b16 %v382, %v380
    %v427 = vpack.c.b16 %v385, %v383
    %v428 = vpack.c.b16 %v386, %v384
    %v429 = vpack.c.b16 %v389, %v387
    %v430 = vpack.c.b16 %v390, %v388
    %v431 = vpack.c.b16 %v393, %v391
    %v432 = vpack.c.b16 %v394, %v392
    %v433 = vpack.c.b16 %v397, %v395
    %v434 = vpack.c.b16 %v398, %v396
    %v435 = vpack.c.b16 %v401, %v399
    %v436 = vpack.c.b16 %v402, %v400
    %v437 = vpack.c.b16 %v405, %v403
    %v438 = vpack.c.b16 %v406, %v404
    %471 = vmatprep.subr.bf16.mxu0 %v408
    %472 = vmatpush1.bf16.msra.mxu0 %v407
    %473 = vmatprep.subr.bf16.mxu0 %v410
    %474 = vmatpush1.bf16.msra.mxu0 %v409
    %475 = vmatprep.subr.bf16.mxu0 %v412
    %476 = vmatpush1.bf16.msra.mxu0 %v411
    %477 = vmatprep.subr.bf16.mxu0 %v414
    %478 = vmatpush1.bf16.msra.mxu0 %v413
    %479 = vmatprep.subr.bf16.mxu0 %v416
    %480 = vmatpush1.bf16.msra.mxu0 %v415
    %481 = vmatprep.subr.bf16.mxu0 %v418
    %482 = vmatpush1.bf16.msra.mxu0 %v417
    %483 = vmatprep.subr.bf16.mxu0 %v420
    %484 = vmatpush1.bf16.msra.mxu0 %v419
    %485 = vmatprep.subr.bf16.mxu0 %v422
    %486 = vmatpush1.bf16.msra.mxu0 %v421
    %487 = vmatprep.subr.bf16.mxu0 %v424
    %488 = vmatpush1.bf16.msra.mxu0 %v423
    %489 = vmatprep.subr.bf16.mxu0 %v426
    %490 = vmatpush1.bf16.msra.mxu0 %v425
    %491 = vmatprep.subr.bf16.mxu0 %v428
    %492 = vmatpush1.bf16.msra.mxu0 %v427
    %493 = vmatprep.subr.bf16.mxu0 %v430
    %494 = vmatpush1.bf16.msra.mxu0 %v429
    %495 = vmatprep.subr.bf16.mxu0 %v432
    %496 = vmatpush1.bf16.msra.mxu0 %v431
    %497 = vmatprep.subr.bf16.mxu0 %v434
    %498 = vmatpush1.bf16.msra.mxu0 %v433
    %499 = vmatprep.subr.bf16.mxu0 %v436
    %500 = vmatpush1.bf16.msra.mxu0 %v435
    %501 = vmatprep.subr.bf16.mxu0 %v438
    %502 = vmatpush1.bf16.msra.mxu0 %v437
    %503 = vmatprep.mubr.bf16.mxu0 %v264
    %504 = vmatmul.mubr.bf16.gmra.mrb[0].mxu0 %v263
    %v505 = vpop.f32.mrb[0].mxu0
    %v506 = vadd.f32 %v304, %v505
    %v507 = vpop.f32.mrb[0].mxu0
    %v508 = vadd.f32 %v308, %v507
    %v509 = vpop.f32.mrb[0].mxu0
    %v510 = vadd.f32 %v304, %v509
    %v511 = vpop.f32.mrb[0].mxu0
    %v512 = vadd.f32 %v308, %v511
    %513 = vmatprep.mubr.bf16.mxu0 %v266
    %514 = vmatmul.mubr.bf16.gmra.mrb[0].mxu0 %v265
    %v515 = vpop.f32.mrb[0].mxu0
    %v516 = vadd.f32 %v304, %v515
    %v517 = vpop.f32.mrb[0].mxu0
    %v518 = vadd.f32 %v308, %v517
    %v519 = vpop.f32.mrb[0].mxu0
    %v520 = vadd.f32 %v304, %v519
    %v521 = vpop.f32.mrb[0].mxu0
    %v522 = vadd.f32 %v308, %v521
    %523 = vdwg.mxu0
    %v524 = vmul.f32 %v506, 0.2
    %v525 = vmul.f32 %v508, 0.2
    %v526 = vmul.f32 %v510, 0.2
    %v527 = vmul.f32 %v512, 0.2
    %v528 = vmul.f32 %v516, 0.2
    %v529 = vmul.f32 %v518, 0.2
    %v530 = vmul.f32 %v520, 0.2
    %v531 = vmul.f32 %v522, 0.2
    %v532 = vmax.f32 %v506, %v524
    %v533 = vmax.f32 %v508, %v525
    %v534 = vmax.f32 %v510, %v526
    %v535 = vmax.f32 %v512, %v527
    %v536 = vmax.f32 %v516, %v528
    %v537 = vmax.f32 %v518, %v529
    %v538 = vmax.f32 %v520, %v530
    %v539 = vmax.f32 %v522, %v531
    %v540 = vld [vmem:[%s5] sm:$0x3]
    %v541 = vpack.c.bf16 %v534, %v532
    %v542 = vpack.c.bf16 %v535, %v533
    %v543 = vpack.c.bf16 %v538, %v536
    %v544 = vpack.c.bf16 %v539, %v537
    %s545 = sld [smem:[#allocation2]]
    %v546 = vstv %s545
    %v549 = vunpack.c.l.s4 1966171168
    %v550 = vunpack.c.0.s8 %v549
    %v551 = vlaneseq
    %v552 = vshrl.u32 %v551, 7
    %v553 = vsub.s32 %v550, %v552
    %v554 = vrot.slane %v540, %v553
    %v555 = vcombine.high %v554, %v554
    %v557 = vunpack.c.l.s4 1966171168
    %v558 = vunpack.c.0.s8 %v557
    %v559 = vlaneseq
    %v560 = vshrl.u32 %v559, 7
    %v561 = vsub.s32 %v558, %v560
    %v562 = vrot.slane %v554, %v561
    %v564 = vunpack.c.l.s4 1966171168
    %v565 = vunpack.c.0.s8 %v564
    %v566 = vlaneseq
    %v567 = vshrl.u32 %v566, 7
    %v568 = vsub.s32 %v565, %v567
    %v569 = vrot.slane %v555, %v568
    %572 = vmatprep.subr.bf16.mxu0 %v542
    %573 = vmatpush1.bf16.xpose.msra.mxu0 %v541
    %574 = vmatprep.subr.bf16.mxu0 %v544
    %575 = vmatpush1.bf16.xpose.msra.mxu0 %v543
    %576 = vmatprep.subr.bf16.mxu0 0
    %577 = vmatpush1.bf16.xpose.msra.mxu0 0
    %578 = vmatprep.subr.bf16.mxu0 0
    %579 = vmatpush1.bf16.xpose.msra.mxu0 0
    %580 = vmatprep.subr.bf16.mxu0 0
    %581 = vmatpush1.bf16.xpose.msra.mxu0 0
    %582 = vmatprep.subr.bf16.mxu0 0
    %583 = vmatpush1.bf16.xpose.msra.mxu0 0
    %584 = vmatprep.subr.bf16.mxu0 0
    %585 = vmatpush1.bf16.xpose.msra.mxu0 0
    %586 = vmatprep.subr.bf16.mxu0 0
    %587 = vmatpush1.bf16.xpose.msra.mxu0 0
    %588 = vmatprep.subr.bf16.mxu0 0
    %589 = vmatpush1.bf16.xpose.msra.mxu0 0
    %590 = vmatprep.subr.bf16.mxu0 0
    %591 = vmatpush1.bf16.xpose.msra.mxu0 0
    %592 = vmatprep.subr.bf16.mxu0 0
    %593 = vmatpush1.bf16.xpose.msra.mxu0 0
    %594 = vmatprep.subr.bf16.mxu0 0
    %595 = vmatpush1.bf16.xpose.msra.mxu0 0
    %596 = vmatprep.subr.bf16.mxu0 0
    %597 = vmatpush1.bf16.xpose.msra.mxu0 0
    %598 = vmatprep.subr.bf16.mxu0 0
    %599 = vmatpush1.bf16.xpose.msra.mxu0 0
    %600 = vmatprep.subr.bf16.mxu0 0
    %601 = vmatpush1.bf16.xpose.msra.mxu0 0
    %602 = vmatprep.subr.bf16.mxu0 0
    %603 = vmatpush1.bf16.xpose.msra.mxu0 0
    %604 = vmatprep.mubr.bf16.mxu0 %v569
    %605 = vmatmul.mubr.bf16.gmra.mrb[0].mxu0 %v562
    %v606 = vpop.f32.mrb[0].mxu0
    %v607 = vadd.f32 %v546, %v606
    %v608 = vpop.f32.mrb[0].mxu0
    %v609 = vpop.f32.mrb[0].mxu0
    %v610 = vpop.f32.mrb[0].mxu0
    %611 = vdwg.mxu0
    %v612 = vxor.u32 %v607, 2147483648
    %v613 = vmul.f32 %v612, 1.442695
    %v614 = vpow.pop %v613
    %v615 = vadd.f32 %v614, 1.0
    %v616 = vrcp.pop %v615
    %v617 = vmul.f32 1.0, %v616
    %vm618 = vcmask 253952
    %619 = vst.msk [vmem:[#allocation9] sm:$0x1] %vm618, %v617
    // Predicated region
    $region42: #{tpu_custom_call.1} parent=1 // pred_check
      _
    $region43: #{tpu_custom_call.1} parent=1 // pred_check_branch
      %621 = sbr.rel (0) target = $region45
    $region44: #{tpu_custom_call.1} parent=1 // pred_region
      %s623 = ssub.s32 16, 16
      %624 = vsyncadd [#allocation5], %s623
      %s626 = sshll.u32 [#allocation9], 4
      %s627 = int_to_ptr.vmem [resolvable:$true] %s626
      %629 = dma.vmem_to_hbm [thread:$0]  %s627, 16, %s7, [#allocation5]
    $region45: #{tpu_custom_call.1} parent=1 // pred_fallthru
      _
    // Predicated region
    $region46: #{tpu_custom_call.1} parent=1 // pred_check
      _
    $region47: #{tpu_custom_call.1} parent=1 // pred_check_branch
      %631 = sbr.rel (0) target = $region49
    $region48: #{tpu_custom_call.1} parent=1 // pred_region
      %632 = dma.done [#allocation5], 16
    $region49: #{tpu_custom_call.1} parent=1 // pred_fallthru
      _
    %633 = vsyncpa [#allocation4], 1
    %634 = vsyncpa [#allocation7], 1
    %635 = vsyncpa [#allocation5], 1

</llo_original>
